<compile_context>
chip_gen: v5e
topology: v5e:2x2
jax: 0.10.0
libtpu: 0.0.40
codegen_flags: <defaults>
</compile_context>

<pallas_src>
import jax
import jax.numpy as jnp
import numpy as np
from jax import lax
from jax.experimental import pallas as pl
from jax.experimental.pallas import tpu as pltpu


def _round_up(x, m):
    return ((x + m - 1) // m) * m


def _sigloss_kernel(x_ref, y_ref, out_ref):
    X = x_ref[...].astype(jnp.float32)            # (bt, L, D)
    Y = y_ref[...].astype(jnp.float32)
    bt, L, D = X.shape
    Lm1 = L - 1
    P = 3 * bt                                    # stacked (xx, yy, xy) problems
    W = _round_up(L, 128)                         # lane-dense working width

    # ---- path increments, zero-padded along time to width W (one-time VPU work) ----
    dX = X[:, 1:, :] - X[:, :-1, :]               # (bt, Lm1, D)
    dY = Y[:, 1:, :] - Y[:, :-1, :]
    zpad = jnp.zeros((bt, W - Lm1, D), jnp.float32)
    dZ = jnp.concatenate([dX, zpad, dY, zpad], axis=1)        # (bt, 2W, D)

    # ---- ONE fused Gram matmul; xx/yy/xy blocks are tile-aligned slices ----
    GG = jnp.einsum('bid,bjd->bij', dZ, dZ,
                    preferred_element_type=jnp.float32)       # (bt, 2W, 2W)
    G = jnp.concatenate([GG[:, :W, :W],           # <dX_i, dX_j>
                         GG[:, W:, W:],           # <dY_i, dY_j>
                         GG[:, :W, W:]],          # <dX_i, dY_j>
                        axis=0)                   # (P, W, W)
    Gm1 = G - 1.0                                 # hoisted out of the row loop

    # ---- prefix-sum matrices, built once (tri trick: cumsum == MXU matmul) ----
    rr = lax.broadcasted_iota(jnp.int32, (W, W), 0)
    cc = lax.broadcasted_iota(jnp.int32, (W, W), 1)
    SA = ((rr >= 1) & (rr <= cc)).astype(jnp.float32)   # sum_{1<=m<=c} prev[m]
    SB = (rr < cc).astype(jnp.float32)                  # sum_{m<c} (prev*gm1)[m]

    # ---- Goursat PDE (solver=0):  prev[:, c] == K[:, i, c]  (lane 0 is the constant
    #      K[:, i, 0] == 1; lanes >= L are benign padding that never feeds back). ----
    #   K[:, i+1, c] = 1 + sum_{m=1..c} K[:, i, m] + sum_{m=0..c-1} K[:, i, m]*(G[:, i, m]-1)
    prev = jnp.ones((P, W), jnp.float32)          # K[:, 0, :] = 1 (allocated once)
    for i in range(Lm1):                          # static unroll: L is small here
        a = prev * Gm1[:, i, :]
        prev = 1.0 + jnp.dot(prev, SA, preferred_element_type=jnp.float32) \
                   + jnp.dot(a, SB, preferred_element_type=jnp.float32)

    # prev[:, Lm1] == K[:, -1, -1] for the stacked problems; weighted, masked reduce.
    lane = lax.broadcasted_iota(jnp.int32, (P, W), 1)
    row = lax.broadcasted_iota(jnp.int32, (P, W), 0)
    corner = jnp.where(lane == Lm1, prev, 0.0)
    wts = jnp.where(row < 2 * bt, 1.0, -2.0)      # +1 (xx), +1 (yy), -2 (xy)
    dist_partial = jnp.sum(corner * wts)          # sum_b  k_xx + k_yy - 2 k_xy
    base_partial = jnp.sum((X[:, 0, :] - Y[:, 0, :]) ** 2)

    # lane-dense (8, 128) partial-sum block: [0,0] = dist partial, [0,1] = base partial
    lane_o = lax.broadcasted_iota(jnp.int32, (8, 128), 1)
    row_o = lax.broadcasted_iota(jnp.int32, (8, 128), 0)
    out_ref[...] = (jnp.where((row_o == 0) & (lane_o == 0), dist_partial, 0.0)
                    + jnp.where((row_o == 0) & (lane_o == 1), base_partial, 0.0))


def sigloss_pallas(X, Y, *, batch_tile=8):
    assert X.shape == Y.shape and X.ndim == 3, "expected (B, L, D) inputs"
    B, L, D = X.shape
    bt = max(1, min(batch_tile, B))
    nb = pl.cdiv(B, bt)
    Bp = nb * bt
    if Bp != B:
        # Zero-padded paths give k_xx = k_yy = k_xy = 1 and a zero base term,
        # i.e. exactly 0 contribution to every partial sum below.
        X = jnp.concatenate([X, jnp.zeros((Bp - B, L, D), X.dtype)], axis=0)
        Y = jnp.concatenate([Y, jnp.zeros((Bp - B, L, D), Y.dtype)], axis=0)

    out = pl.pallas_call(
        _sigloss_kernel,
        out_shape=jax.ShapeDtypeStruct((nb * 8, 128), jnp.float32),
        grid=(nb,),
        in_specs=[
            pl.BlockSpec((bt, L, D), lambda i: (i, 0, 0)),
            pl.BlockSpec((bt, L, D), lambda i: (i, 0, 0)),
        ],
        out_specs=pl.BlockSpec((8, 128), lambda i: (i, 0)),
        compiler_params=pltpu.CompilerParams(
            dimension_semantics=("parallel",)),
    )(X, Y)

    parts = out.reshape(nb, 8, 128)
    dist = jnp.sum(parts[:, 0, 0]) / B
    base = jnp.sum(parts[:, 0, 1]) / (B * D)
    return base + dist


# ---------------- pure NumPy reference (mirrors the PyTorch module) ----------------
def _sig_kernel_ref(x, y):
    B, M, _ = x.shape
    N = y.shape[1]
    K = np.zeros((B, M, N), dtype=np.float64)
    K[:, 0, :] = 1.0
    K[:, :, 0] = 1.0
    for i in range(M - 1):
        for j in range(N - 1):
            inc = np.sum((x[:, i + 1] - x[:, i]) * (y[:, j + 1] - y[:, j]), axis=-1)
            K[:, i + 1, j + 1] = (K[:, i + 1, j] + K[:, i, j + 1]
                                  + K[:, i, j] * (inc - 1.0))
    return K[:, -1, -1]


def _sigloss_ref(x, y):
    x = np.asarray(x, np.float64)
    y = np.asarray(y, np.float64)
    k_xx = _sig_kernel_ref(x, x)
    k_yy = _sig_kernel_ref(y, y)
    k_xy = _sig_kernel_ref(x, y)
    dist = k_xx.mean() + k_yy.mean() - 2.0 * k_xy.mean()
    return ((x[:, 0, :] - y[:, 0, :]) ** 2).mean() + dist
# -----------------------------------------------------------------------------------


if __name__ == "__main__":
    key = jax.random.PRNGKey(0)
    kx, ky = jax.random.split(key)
    B, L, D = 2, 8, 4
    X = jax.random.normal(kx, (B, L, D), dtype=jnp.float32)
    Y = jax.random.normal(ky, (B, L, D), dtype=jnp.float32)

    out = jax.jit(sigloss_pallas)(X, Y)
    out = jax.block_until_ready(out)

    ref = _sigloss_ref(np.asarray(X), np.asarray(Y))
    assert abs(float(out) - float(ref)) <= 1e-3 * max(1.0, abs(float(ref))), (
        f"mismatch: pallas={float(out)} ref={float(ref)}")

    print("KERNEL_OK")
</pallas_src>

<mosaic_0001>
module attributes {stable_mosaic.version = 11 : i64} {
  func.func @_sigloss_kernel(%arg0: i32, %arg1: memref<2x8x4xf32, #tpu.memory_space<vmem>>, %arg2: memref<2x8x4xf32, #tpu.memory_space<vmem>>, %arg3: memref<8x128xf32, #tpu.memory_space<vmem>>) attributes {dimension_semantics = [#tpu.dimension_semantics<parallel>], iteration_bounds = array<i64: 1>, scalar_prefetch = 0 : i64, scratch_operands = 0 : i64, tpu.core_type = #tpu.core_type<tc>, window_params = [{transform_indices = @transform_0, window_bounds = array<i64: 2, 8, 4>}, {transform_indices = @transform_1, window_bounds = array<i64: 2, 8, 4>}, {transform_indices = @transform_2, window_bounds = array<i64: 8, 128>}]} {
    %c0 = arith.constant 0 : index
    %c0_0 = arith.constant 0 : index
    %c0_1 = arith.constant 0 : index
    %0 = vector.load %arg1[%c0, %c0_0, %c0_1] : memref<2x8x4xf32, #tpu.memory_space<vmem>>, vector<2x8x4xf32>
    %c0_2 = arith.constant 0 : index
    %c0_3 = arith.constant 0 : index
    %c0_4 = arith.constant 0 : index
    %1 = vector.load %arg2[%c0_2, %c0_3, %c0_4] : memref<2x8x4xf32, #tpu.memory_space<vmem>>, vector<2x8x4xf32>
    %2 = vector.extract_strided_slice %0 {offsets = [0, 1, 0], sizes = [2, 7, 4], strides = [1, 1, 1]} : vector<2x8x4xf32> to vector<2x7x4xf32>
    %3 = vector.extract_strided_slice %0 {offsets = [0, 0, 0], sizes = [2, 7, 4], strides = [1, 1, 1]} : vector<2x8x4xf32> to vector<2x7x4xf32>
    %4 = arith.subf %2, %3 : vector<2x7x4xf32>
    %5 = vector.extract_strided_slice %1 {offsets = [0, 1, 0], sizes = [2, 7, 4], strides = [1, 1, 1]} : vector<2x8x4xf32> to vector<2x7x4xf32>
    %6 = vector.extract_strided_slice %1 {offsets = [0, 0, 0], sizes = [2, 7, 4], strides = [1, 1, 1]} : vector<2x8x4xf32> to vector<2x7x4xf32>
    %7 = arith.subf %5, %6 : vector<2x7x4xf32>
    %cst = arith.constant 0.000000e+00 : f32
    %8 = vector.broadcast %cst : f32 to vector<2x121x4xf32>
    %9 = tpu.concatenate %4, %8, %7, %8 in 1 : vector<2x7x4xf32>, vector<2x121x4xf32>, vector<2x7x4xf32>, vector<2x121x4xf32> -> vector<2x256x4xf32>
    "tpu.trace_start"() <{level = 10 : i32, message = "bid,bjd->bij"}> : () -> ()
    %cst_5 = arith.constant dense<0.000000e+00> : vector<2x256x256xf32>
    %10 = tpu.matmul %9, %9, %cst_5 {dimension_numbers = #tpu.dot_dimension_numbers<[2], [2], [1], [1], [0, 0, 0, 1, 1, 1], [0], [0]>} : vector<2x256x4xf32>, vector<2x256x4xf32>, vector<2x256x256xf32> -> vector<2x256x256xf32>
    "tpu.trace_stop"() : () -> ()
    %11 = vector.extract_strided_slice %10 {offsets = [0, 0, 0], sizes = [2, 128, 128], strides = [1, 1, 1]} : vector<2x256x256xf32> to vector<2x128x128xf32>
    %12 = vector.extract_strided_slice %10 {offsets = [0, 128, 128], sizes = [2, 128, 128], strides = [1, 1, 1]} : vector<2x256x256xf32> to vector<2x128x128xf32>
    %13 = vector.extract_strided_slice %10 {offsets = [0, 0, 128], sizes = [2, 128, 128], strides = [1, 1, 1]} : vector<2x256x256xf32> to vector<2x128x128xf32>
    %14 = tpu.concatenate %11, %12, %13 in 0 : vector<2x128x128xf32>, vector<2x128x128xf32>, vector<2x128x128xf32> -> vector<6x128x128xf32>
    %cst_6 = arith.constant 1.000000e+00 : f32
    %15 = vector.broadcast %cst_6 : f32 to vector<6x128x128xf32>
    %16 = arith.subf %14, %15 : vector<6x128x128xf32>
    %17 = tpu.iota {dimensions = array<i32: 0>} : vector<128x128xi32>
    %18 = tpu.iota {dimensions = array<i32: 1>} : vector<128x128xi32>
    %c1_i32 = arith.constant 1 : i32
    %19 = vector.broadcast %c1_i32 : i32 to vector<128x128xi32>
    %20 = arith.cmpi sge, %17, %19 : vector<128x128xi32>
    %21 = arith.cmpi sle, %17, %18 : vector<128x128xi32>
    %22 = arith.andi %20, %21 : vector<128x128xi1>
    %23 = arith.extui %22 : vector<128x128xi1> to vector<128x128xi32>
    %24 = arith.sitofp %23 : vector<128x128xi32> to vector<128x128xf32>
    %25 = arith.cmpi slt, %17, %18 : vector<128x128xi32>
    %26 = arith.extui %25 : vector<128x128xi1> to vector<128x128xi32>
    %27 = arith.sitofp %26 : vector<128x128xi32> to vector<128x128xf32>
    %cst_7 = arith.constant 1.000000e+00 : f32
    %28 = vector.broadcast %cst_7 : f32 to vector<6x128xf32>
    %29 = vector.extract_strided_slice %16 {offsets = [0, 0, 0], sizes = [6, 1, 128], strides = [1, 1, 1]} : vector<6x128x128xf32> to vector<6x1x128xf32>
    %30 = vector.shape_cast %29 : vector<6x1x128xf32> to vector<6x128xf32>
    %31 = arith.mulf %28, %30 : vector<6x128xf32>
    %cst_8 = arith.constant dense<0.000000e+00> : vector<6x128xf32>
    %32 = tpu.matmul %28, %24, %cst_8 {dimension_numbers = #tpu.dot_dimension_numbers<[1], [0], [0], [1], [0, 0, 1, 1], [], []>} : vector<6x128xf32>, vector<128x128xf32>, vector<6x128xf32> -> vector<6x128xf32>
    %cst_9 = arith.constant 1.000000e+00 : f32
    %33 = vector.broadcast %cst_9 : f32 to vector<6x128xf32>
    %34 = arith.addf %33, %32 : vector<6x128xf32>
    %cst_10 = arith.constant dense<0.000000e+00> : vector<6x128xf32>
    %35 = tpu.matmul %31, %27, %cst_10 {dimension_numbers = #tpu.dot_dimension_numbers<[1], [0], [0], [1], [0, 0, 1, 1], [], []>} : vector<6x128xf32>, vector<128x128xf32>, vector<6x128xf32> -> vector<6x128xf32>
    %36 = arith.addf %34, %35 : vector<6x128xf32>
    %37 = vector.extract_strided_slice %16 {offsets = [0, 1, 0], sizes = [6, 1, 128], strides = [1, 1, 1]} : vector<6x128x128xf32> to vector<6x1x128xf32>
    %38 = vector.shape_cast %37 : vector<6x1x128xf32> to vector<6x128xf32>
    %39 = arith.mulf %36, %38 : vector<6x128xf32>
    %cst_11 = arith.constant dense<0.000000e+00> : vector<6x128xf32>
    %40 = tpu.matmul %36, %24, %cst_11 {dimension_numbers = #tpu.dot_dimension_numbers<[1], [0], [0], [1], [0, 0, 1, 1], [], []>} : vector<6x128xf32>, vector<128x128xf32>, vector<6x128xf32> -> vector<6x128xf32>
    %cst_12 = arith.constant 1.000000e+00 : f32
    %41 = vector.broadcast %cst_12 : f32 to vector<6x128xf32>
    %42 = arith.addf %41, %40 : vector<6x128xf32>
    %cst_13 = arith.constant dense<0.000000e+00> : vector<6x128xf32>
    %43 = tpu.matmul %39, %27, %cst_13 {dimension_numbers = #tpu.dot_dimension_numbers<[1], [0], [0], [1], [0, 0, 1, 1], [], []>} : vector<6x128xf32>, vector<128x128xf32>, vector<6x128xf32> -> vector<6x128xf32>
    %44 = arith.addf %42, %43 : vector<6x128xf32>
    %45 = vector.extract_strided_slice %16 {offsets = [0, 2, 0], sizes = [6, 1, 128], strides = [1, 1, 1]} : vector<6x128x128xf32> to vector<6x1x128xf32>
    %46 = vector.shape_cast %45 : vector<6x1x128xf32> to vector<6x128xf32>
    %47 = arith.mulf %44, %46 : vector<6x128xf32>
    %cst_14 = arith.constant dense<0.000000e+00> : vector<6x128xf32>
    %48 = tpu.matmul %44, %24, %cst_14 {dimension_numbers = #tpu.dot_dimension_numbers<[1], [0], [0], [1], [0, 0, 1, 1], [], []>} : vector<6x128xf32>, vector<128x128xf32>, vector<6x128xf32> -> vector<6x128xf32>
    %cst_15 = arith.constant 1.000000e+00 : f32
    %49 = vector.broadcast %cst_15 : f32 to vector<6x128xf32>
    %50 = arith.addf %49, %48 : vector<6x128xf32>
    %cst_16 = arith.constant dense<0.000000e+00> : vector<6x128xf32>
    %51 = tpu.matmul %47, %27, %cst_16 {dimension_numbers = #tpu.dot_dimension_numbers<[1], [0], [0], [1], [0, 0, 1, 1], [], []>} : vector<6x128xf32>, vector<128x128xf32>, vector<6x128xf32> -> vector<6x128xf32>
    %52 = arith.addf %50, %51 : vector<6x128xf32>
    %53 = vector.extract_strided_slice %16 {offsets = [0, 3, 0], sizes = [6, 1, 128], strides = [1, 1, 1]} : vector<6x128x128xf32> to vector<6x1x128xf32>
    %54 = vector.shape_cast %53 : vector<6x1x128xf32> to vector<6x128xf32>
    %55 = arith.mulf %52, %54 : vector<6x128xf32>
    %cst_17 = arith.constant dense<0.000000e+00> : vector<6x128xf32>
    %56 = tpu.matmul %52, %24, %cst_17 {dimension_numbers = #tpu.dot_dimension_numbers<[1], [0], [0], [1], [0, 0, 1, 1], [], []>} : vector<6x128xf32>, vector<128x128xf32>, vector<6x128xf32> -> vector<6x128xf32>
    %cst_18 = arith.constant 1.000000e+00 : f32
    %57 = vector.broadcast %cst_18 : f32 to vector<6x128xf32>
    %58 = arith.addf %57, %56 : vector<6x128xf32>
    %cst_19 = arith.constant dense<0.000000e+00> : vector<6x128xf32>
    %59 = tpu.matmul %55, %27, %cst_19 {dimension_numbers = #tpu.dot_dimension_numbers<[1], [0], [0], [1], [0, 0, 1, 1], [], []>} : vector<6x128xf32>, vector<128x128xf32>, vector<6x128xf32> -> vector<6x128xf32>
    %60 = arith.addf %58, %59 : vector<6x128xf32>
    %61 = vector.extract_strided_slice %16 {offsets = [0, 4, 0], sizes = [6, 1, 128], strides = [1, 1, 1]} : vector<6x128x128xf32> to vector<6x1x128xf32>
    %62 = vector.shape_cast %61 : vector<6x1x128xf32> to vector<6x128xf32>
    %63 = arith.mulf %60, %62 : vector<6x128xf32>
    %cst_20 = arith.constant dense<0.000000e+00> : vector<6x128xf32>
    %64 = tpu.matmul %60, %24, %cst_20 {dimension_numbers = #tpu.dot_dimension_numbers<[1], [0], [0], [1], [0, 0, 1, 1], [], []>} : vector<6x128xf32>, vector<128x128xf32>, vector<6x128xf32> -> vector<6x128xf32>
    %cst_21 = arith.constant 1.000000e+00 : f32
    %65 = vector.broadcast %cst_21 : f32 to vector<6x128xf32>
    %66 = arith.addf %65, %64 : vector<6x128xf32>
    %cst_22 = arith.constant dense<0.000000e+00> : vector<6x128xf32>
    %67 = tpu.matmul %63, %27, %cst_22 {dimension_numbers = #tpu.dot_dimension_numbers<[1], [0], [0], [1], [0, 0, 1, 1], [], []>} : vector<6x128xf32>, vector<128x128xf32>, vector<6x128xf32> -> vector<6x128xf32>
    %68 = arith.addf %66, %67 : vector<6x128xf32>
    %69 = vector.extract_strided_slice %16 {offsets = [0, 5, 0], sizes = [6, 1, 128], strides = [1, 1, 1]} : vector<6x128x128xf32> to vector<6x1x128xf32>
    %70 = vector.shape_cast %69 : vector<6x1x128xf32> to vector<6x128xf32>
    %71 = arith.mulf %68, %70 : vector<6x128xf32>
    %cst_23 = arith.constant dense<0.000000e+00> : vector<6x128xf32>
    %72 = tpu.matmul %68, %24, %cst_23 {dimension_numbers = #tpu.dot_dimension_numbers<[1], [0], [0], [1], [0, 0, 1, 1], [], []>} : vector<6x128xf32>, vector<128x128xf32>, vector<6x128xf32> -> vector<6x128xf32>
    %cst_24 = arith.constant 1.000000e+00 : f32
    %73 = vector.broadcast %cst_24 : f32 to vector<6x128xf32>
    %74 = arith.addf %73, %72 : vector<6x128xf32>
    %cst_25 = arith.constant dense<0.000000e+00> : vector<6x128xf32>
    %75 = tpu.matmul %71, %27, %cst_25 {dimension_numbers = #tpu.dot_dimension_numbers<[1], [0], [0], [1], [0, 0, 1, 1], [], []>} : vector<6x128xf32>, vector<128x128xf32>, vector<6x128xf32> -> vector<6x128xf32>
    %76 = arith.addf %74, %75 : vector<6x128xf32>
    %77 = vector.extract_strided_slice %16 {offsets = [0, 6, 0], sizes = [6, 1, 128], strides = [1, 1, 1]} : vector<6x128x128xf32> to vector<6x1x128xf32>
    %78 = vector.shape_cast %77 : vector<6x1x128xf32> to vector<6x128xf32>
    %79 = arith.mulf %76, %78 : vector<6x128xf32>
    %cst_26 = arith.constant dense<0.000000e+00> : vector<6x128xf32>
    %80 = tpu.matmul %76, %24, %cst_26 {dimension_numbers = #tpu.dot_dimension_numbers<[1], [0], [0], [1], [0, 0, 1, 1], [], []>} : vector<6x128xf32>, vector<128x128xf32>, vector<6x128xf32> -> vector<6x128xf32>
    %cst_27 = arith.constant 1.000000e+00 : f32
    %81 = vector.broadcast %cst_27 : f32 to vector<6x128xf32>
    %82 = arith.addf %81, %80 : vector<6x128xf32>
    %cst_28 = arith.constant dense<0.000000e+00> : vector<6x128xf32>
    %83 = tpu.matmul %79, %27, %cst_28 {dimension_numbers = #tpu.dot_dimension_numbers<[1], [0], [0], [1], [0, 0, 1, 1], [], []>} : vector<6x128xf32>, vector<128x128xf32>, vector<6x128xf32> -> vector<6x128xf32>
    %84 = arith.addf %82, %83 : vector<6x128xf32>
    %85 = tpu.iota {dimensions = array<i32: 1>} : vector<6x128xi32>
    %86 = tpu.iota {dimensions = array<i32: 0>} : vector<6x128xi32>
    %c7_i32 = arith.constant 7 : i32
    %87 = vector.broadcast %c7_i32 : i32 to vector<6x128xi32>
    %88 = arith.cmpi eq, %85, %87 : vector<6x128xi32>
    %cst_29 = arith.constant 0.000000e+00 : f32
    %89 = vector.broadcast %cst_29 : f32 to vector<6x128xf32>
    %90 = arith.select %88, %84, %89 : vector<6x128xi1>, vector<6x128xf32>
    %c4_i32 = arith.constant 4 : i32
    %91 = vector.broadcast %c4_i32 : i32 to vector<6x128xi32>
    %92 = arith.cmpi slt, %86, %91 : vector<6x128xi32>
    %cst_30 = arith.constant 1.000000e+00 : f32
    %cst_31 = arith.constant -2.000000e+00 : f32
    %93 = vector.broadcast %cst_30 : f32 to vector<6x128xf32>
    %94 = vector.broadcast %cst_31 : f32 to vector<6x128xf32>
    %95 = arith.select %92, %93, %94 : vector<6x128xi1>, vector<6x128xf32>
    %96 = arith.mulf %90, %95 : vector<6x128xf32>
    %97 = vector.shape_cast %96 : vector<6x128xf32> to vector<1x6x128xf32>
    %cst_32 = arith.constant dense<0.000000e+00> : vector<1xf32>
    %98 = vector.multi_reduction <add>, %97, %cst_32 [1, 2] : vector<1x6x128xf32> to vector<1xf32>
    %99 = vector.shape_cast %98 : vector<1xf32> to vector<1x1x1xf32>
    %100 = vector.extract %99[0, 0, 0] : f32 from vector<1x1x1xf32>
    %101 = vector.extract_strided_slice %0 {offsets = [0, 0, 0], sizes = [2, 1, 4], strides = [1, 1, 1]} : vector<2x8x4xf32> to vector<2x1x4xf32>
    %102 = vector.shape_cast %101 : vector<2x1x4xf32> to vector<2x4xf32>
    %103 = vector.extract_strided_slice %1 {offsets = [0, 0, 0], sizes = [2, 1, 4], strides = [1, 1, 1]} : vector<2x8x4xf32> to vector<2x1x4xf32>
    %104 = vector.shape_cast %103 : vector<2x1x4xf32> to vector<2x4xf32>
    %105 = arith.subf %102, %104 : vector<2x4xf32>
    %106 = arith.mulf %105, %105 : vector<2x4xf32>
    %107 = vector.shape_cast %106 : vector<2x4xf32> to vector<1x2x4xf32>
    %cst_33 = arith.constant dense<0.000000e+00> : vector<1xf32>
    %108 = vector.multi_reduction <add>, %107, %cst_33 [1, 2] : vector<1x2x4xf32> to vector<1xf32>
    %109 = vector.shape_cast %108 : vector<1xf32> to vector<1x1x1xf32>
    %110 = vector.extract %109[0, 0, 0] : f32 from vector<1x1x1xf32>
    %111 = tpu.iota {dimensions = array<i32: 1>} : vector<8x128xi32>
    %112 = tpu.iota {dimensions = array<i32: 0>} : vector<8x128xi32>
    %c0_i32 = arith.constant 0 : i32
    %113 = vector.broadcast %c0_i32 : i32 to vector<8x128xi32>
    %114 = arith.cmpi eq, %112, %113 : vector<8x128xi32>
    %c0_i32_34 = arith.constant 0 : i32
    %115 = vector.broadcast %c0_i32_34 : i32 to vector<8x128xi32>
    %116 = arith.cmpi eq, %111, %115 : vector<8x128xi32>
    %117 = arith.andi %114, %116 : vector<8x128xi1>
    %cst_35 = arith.constant 0.000000e+00 : f32
    %118 = vector.broadcast %100 : f32 to vector<8x128xf32>
    %119 = vector.broadcast %cst_35 : f32 to vector<8x128xf32>
    %120 = arith.select %117, %118, %119 : vector<8x128xi1>, vector<8x128xf32>
    %c0_i32_36 = arith.constant 0 : i32
    %121 = vector.broadcast %c0_i32_36 : i32 to vector<8x128xi32>
    %122 = arith.cmpi eq, %112, %121 : vector<8x128xi32>
    %c1_i32_37 = arith.constant 1 : i32
    %123 = vector.broadcast %c1_i32_37 : i32 to vector<8x128xi32>
    %124 = arith.cmpi eq, %111, %123 : vector<8x128xi32>
    %125 = arith.andi %122, %124 : vector<8x128xi1>
    %cst_38 = arith.constant 0.000000e+00 : f32
    %126 = vector.broadcast %110 : f32 to vector<8x128xf32>
    %127 = vector.broadcast %cst_38 : f32 to vector<8x128xf32>
    %128 = arith.select %125, %126, %127 : vector<8x128xi1>, vector<8x128xf32>
    %129 = arith.addf %120, %128 : vector<8x128xf32>
    %c0_39 = arith.constant 0 : index
    %c0_40 = arith.constant 0 : index
    %130 = vector.load %arg3[%c0_39, %c0_40] : memref<8x128xf32, #tpu.memory_space<vmem>>, vector<8x128xf32>
    tpu.vector_store %arg3[%c0_39, %c0_40], %129 {strides = array<i32>} : memref<8x128xf32, #tpu.memory_space<vmem>>, vector<8x128xf32>,
    return
  }
  func.func @transform_0(%arg0: i32) -> (i32, i32, i32) {
    %c0_i32 = arith.constant 0 : i32
    %c0_i32_0 = arith.constant 0 : i32
    %c0_i32_1 = arith.constant 0 : i32
    return %arg0, %c0_i32, %c0_i32_0 : i32, i32, i32
  }
  func.func @transform_1(%arg0: i32) -> (i32, i32, i32) {
    %c0_i32 = arith.constant 0 : i32
    %c0_i32_0 = arith.constant 0 : i32
    %c0_i32_1 = arith.constant 0 : i32
    return %arg0, %c0_i32, %c0_i32_0 : i32, i32, i32
  }
  func.func @transform_2(%arg0: i32) -> (i32, i32) {
    %c0_i32 = arith.constant 0 : i32
    %c0_i32_0 = arith.constant 0 : i32
    return %arg0, %c0_i32 : i32, i32
  }
}

</mosaic_0001>

<llo_original>
// kernel: sigloss_pallas.1
$region0: #{sigloss_pallas.1}
  #allocation0 [shape = 'u32[]', space=smem, size = 0x4, offset = 0x4, fixed_abs, tag = 'smem constant byte address 0x4 - core index']
  #allocation1 [shape = 'u32[72,128]{1,0:T(1,128)}', space=vmem, size = 0x9000, scoped, tag = 'internal scratch']
  %s0 = inlined_call_operand.vmem [shape: f32[2,8,4], index: 0, kind: input, shape index: {}]
  %s1 = inlined_call_operand.vmem [shape: f32[2,8,4], index: 1, kind: input, shape index: {}]
  %s2 = inlined_call_operand.vmem [shape: f32[8,128], index: 2, kind: output, shape index: {}]
  %s3 = sld [smem:[#allocation0]]
  $region18: #{sigloss_pallas.1} parent=0
    _
  %s5 = ssub.s32 1, %s3
  %s6 = scalar_select 0, %s5, %s3
  // Predicated region
  $region2: #{sigloss_pallas.1} parent=0 // pred_check
    _
  $region3: #{sigloss_pallas.1} parent=0 // pred_check_branch
    %8 = sbr.rel (0) target = $region5
  $region4: #{sigloss_pallas.1} parent=0 // pred_region
    _
  $region5: #{sigloss_pallas.1} parent=0 // pred_fallthru
    _
  // Predicated region
  $region6: #{sigloss_pallas.1} parent=0 // pred_check
    _
  $region7: #{sigloss_pallas.1} parent=0 // pred_check_branch
    %10 = sbr.rel (0) target = $region9
  $region8: #{sigloss_pallas.1} parent=0 // pred_region
    _
  $region9: #{sigloss_pallas.1} parent=0 // pred_fallthru
    _
  %v11 = vld [vmem:[%s0] sm:$0xff]
  %v12 = vld [vmem:[%s0 + $0x8] sm:$0xff]
  %v13 = vld [vmem:[%s1] sm:$0xff]
  %v14 = vld [vmem:[%s1 + $0x8] sm:$0xff]
  %v17 = vrot.slane %v11, 7
  %v18 = vrot.slane %v12, 7
  %v21 = vsub.f32 %v11, %v17
  %v22 = vsub.f32 %v12, %v18
  %v25 = vrot.slane %v13, 7
  %v26 = vrot.slane %v14, 7
  %v29 = vsub.f32 %v13, %v25
  %v30 = vsub.f32 %v14, %v26
  %v33 = vrot.slane %v21, 1
  %v34 = vrot.slane %v22, 1
  %v39 = vrot.slane %v29, 1
  %v40 = vrot.slane %v30, 1
  %vm43 = vcmask 1046528
  %v44 = vsel %vm43, %v33, 0.0
  %v45 = vsel %vm43, %v34, 0.0
  %v46 = vsel %vm43, %v39, 0.0
  %v47 = vsel %vm43, %v40, 0.0
  %vm48 = vcmask 31744
  %v50 = vsel %vm48, %v44, 0
  %v53 = vsel %vm48, 0.0, 0
  %v56 = vsel %vm48, %v46, 0
  %58 = vmatpush.xpose.msra.mxu0 %v53
  %59 = vmatpush.xpose.msra.mxu0 %v53
  %60 = vmatpush.xpose.msra.mxu0 %v53
  %61 = vmatpush.xpose.msra.mxu0 %v53
  %62 = vmatpush.xpose.msra.mxu0 %v53
  %63 = vmatpush.xpose.msra.mxu0 %v53
  %64 = vmatpush.xpose.msra.mxu0 %v53
  %65 = vmatpush.xpose.msra.mxu0 %v53
  %66 = vmatpush.xpose.msra.mxu0 %v53
  %67 = vmatpush.xpose.msra.mxu0 %v53
  %68 = vmatpush.xpose.msra.mxu0 %v53
  %69 = vmatpush.xpose.msra.mxu0 %v53
  %70 = vmatpush.xpose.msra.mxu0 %v53
  %71 = vmatpush.xpose.msra.mxu0 %v53
  %72 = vmatpush.xpose.msra.mxu0 %v53
  %73 = vmatpush.xpose.msra.mxu0 %v50
  %74 = vmatmul.f32.gmra.mxu0 %v50
  %v75 = vpop.f32.mrf.mxu0
  %v76 = vadd.f32 0.0, %v75
  %77 = vmatmul.f32.gmra.mxu0 %v53
  %v78 = vpop.f32.mrf.mxu0
  %79 = vmatmul.f32.gmra.mxu0 %v53
  %v80 = vpop.f32.mrf.mxu0
  %81 = vmatmul.f32.gmra.mxu0 %v53
  %v82 = vpop.f32.mrf.mxu0
  %83 = vmatmul.f32.gmra.mxu0 %v53
  %v84 = vpop.f32.mrf.mxu0
  %85 = vmatmul.f32.gmra.mxu0 %v53
  %v86 = vpop.f32.mrf.mxu0
  %87 = vmatmul.f32.gmra.mxu0 %v53
  %v88 = vpop.f32.mrf.mxu0
  %89 = vmatmul.f32.gmra.mxu0 %v53
  %v90 = vpop.f32.mrf.mxu0
  %91 = vmatmul.f32.gmra.mxu0 %v53
  %v92 = vpop.f32.mrf.mxu0
  %93 = vmatmul.f32.gmra.mxu0 %v53
  %v94 = vpop.f32.mrf.mxu0
  %95 = vmatmul.f32.gmra.mxu0 %v53
  %v96 = vpop.f32.mrf.mxu0
  %97 = vmatmul.f32.gmra.mxu0 %v53
  %v98 = vpop.f32.mrf.mxu0
  %99 = vmatmul.f32.gmra.mxu0 %v53
  %v100 = vpop.f32.mrf.mxu0
  %101 = vmatmul.f32.gmra.mxu0 %v53
  %v102 = vpop.f32.mrf.mxu0
  %103 = vmatmul.f32.gmra.mxu0 %v53
  %v104 = vpop.f32.mrf.mxu0
  %105 = vmatmul.f32.gmra.mxu0 %v53
  %v106 = vpop.f32.mrf.mxu0
  %107 = vmatmul.f32.gmra.mxu0 %v56
  %v108 = vpop.f32.mrf.mxu0
  %109 = vmatmul.f32.gmra.mxu0 %v53
  %v110 = vpop.f32.mrf.mxu0
  %111 = vmatmul.f32.gmra.mxu0 %v53
  %v112 = vpop.f32.mrf.mxu0
  %113 = vmatmul.f32.gmra.mxu0 %v53
  %v114 = vpop.f32.mrf.mxu0
  %115 = vmatmul.f32.gmra.mxu0 %v53
  %v116 = vpop.f32.mrf.mxu0
  %117 = vmatmul.f32.gmra.mxu0 %v53
  %v118 = vpop.f32.mrf.mxu0
  %119 = vmatmul.f32.gmra.mxu0 %v53
  %v120 = vpop.f32.mrf.mxu0
  %121 = vmatmul.f32.gmra.mxu0 %v53
  %v122 = vpop.f32.mrf.mxu0
  %123 = vmatmul.f32.gmra.mxu0 %v53
  %v124 = vpop.f32.mrf.mxu0
  %125 = vmatmul.f32.gmra.mxu0 %v53
  %v126 = vpop.f32.mrf.mxu0
  %127 = vmatmul.f32.gmra.mxu0 %v53
  %v128 = vpop.f32.mrf.mxu0
  %129 = vmatmul.f32.gmra.mxu0 %v53
  %v130 = vpop.f32.mrf.mxu0
  %131 = vmatmul.f32.gmra.mxu0 %v53
  %v132 = vpop.f32.mrf.mxu0
  %133 = vmatmul.f32.gmra.mxu0 %v53
  %v134 = vpop.f32.mrf.mxu0
  %135 = vmatmul.f32.gmra.mxu0 %v53
  %v136 = vpop.f32.mrf.mxu0
  %137 = vmatmul.f32.gmra.mxu0 %v53
  %v138 = vpop.f32.mrf.mxu0
  %139 = vdwg.mxu0
  %140 = vmatpush.xpose.msra.mxu0 %v53
  %141 = vmatpush.xpose.msra.mxu0 %v53
  %142 = vmatpush.xpose.msra.mxu0 %v53
  %143 = vmatpush.xpose.msra.mxu0 %v53
  %144 = vmatpush.xpose.msra.mxu0 %v53
  %145 = vmatpush.xpose.msra.mxu0 %v53
  %146 = vmatpush.xpose.msra.mxu0 %v53
  %147 = vmatpush.xpose.msra.mxu0 %v53
  %148 = vmatpush.xpose.msra.mxu0 %v53
  %149 = vmatpush.xpose.msra.mxu0 %v53
  %150 = vmatpush.xpose.msra.mxu0 %v53
  %151 = vmatpush.xpose.msra.mxu0 %v53
  %152 = vmatpush.xpose.msra.mxu0 %v53
  %153 = vmatpush.xpose.msra.mxu0 %v53
  %154 = vmatpush.xpose.msra.mxu0 %v53
  %155 = vmatpush.xpose.msra.mxu0 %v56
  %156 = vmatmul.f32.gmra.mxu0 %v50
  %v157 = vpop.f32.mrf.mxu0
  %v158 = vadd.f32 0.0, %v157
  %159 = vmatmul.f32.gmra.mxu0 %v53
  %v160 = vpop.f32.mrf.mxu0
  %161 = vmatmul.f32.gmra.mxu0 %v53
  %v162 = vpop.f32.mrf.mxu0
  %163 = vmatmul.f32.gmra.mxu0 %v53
  %v164 = vpop.f32.mrf.mxu0
  %165 = vmatmul.f32.gmra.mxu0 %v53
  %v166 = vpop.f32.mrf.mxu0
  %167 = vmatmul.f32.gmra.mxu0 %v53
  %v168 = vpop.f32.mrf.mxu0
  %169 = vmatmul.f32.gmra.mxu0 %v53
  %v170 = vpop.f32.mrf.mxu0
  %171 = vmatmul.f32.gmra.mxu0 %v53
  %v172 = vpop.f32.mrf.mxu0
  %173 = vmatmul.f32.gmra.mxu0 %v53
  %v174 = vpop.f32.mrf.mxu0
  %175 = vmatmul.f32.gmra.mxu0 %v53
  %v176 = vpop.f32.mrf.mxu0
  %177 = vmatmul.f32.gmra.mxu0 %v53
  %v178 = vpop.f32.mrf.mxu0
  %179 = vmatmul.f32.gmra.mxu0 %v53
  %v180 = vpop.f32.mrf.mxu0
  %181 = vmatmul.f32.gmra.mxu0 %v53
  %v182 = vpop.f32.mrf.mxu0
  %183 = vmatmul.f32.gmra.mxu0 %v53
  %v184 = vpop.f32.mrf.mxu0
  %185 = vmatmul.f32.gmra.mxu0 %v53
  %v186 = vpop.f32.mrf.mxu0
  %187 = vmatmul.f32.gmra.mxu0 %v53
  %v188 = vpop.f32.mrf.mxu0
  %189 = vmatmul.f32.gmra.mxu0 %v56
  %v190 = vpop.f32.mrf.mxu0
  %v191 = vadd.f32 0.0, %v190
  %192 = vmatmul.f32.gmra.mxu0 %v53
  %v193 = vpop.f32.mrf.mxu0
  %194 = vmatmul.f32.gmra.mxu0 %v53
  %v195 = vpop.f32.mrf.mxu0
  %196 = vmatmul.f32.gmra.mxu0 %v53
  %v197 = vpop.f32.mrf.mxu0
  %198 = vmatmul.f32.gmra.mxu0 %v53
  %v199 = vpop.f32.mrf.mxu0
  %200 = vmatmul.f32.gmra.mxu0 %v53
  %v201 = vpop.f32.mrf.mxu0
  %202 = vmatmul.f32.gmra.mxu0 %v53
  %v203 = vpop.f32.mrf.mxu0
  %204 = vmatmul.f32.gmra.mxu0 %v53
  %v205 = vpop.f32.mrf.mxu0
  %206 = vmatmul.f32.gmra.mxu0 %v53
  %v207 = vpop.f32.mrf.mxu0
  %208 = vmatmul.f32.gmra.mxu0 %v53
  %v209 = vpop.f32.mrf.mxu0
  %210 = vmatmul.f32.gmra.mxu0 %v53
  %v211 = vpop.f32.mrf.mxu0
  %212 = vmatmul.f32.gmra.mxu0 %v53
  %v213 = vpop.f32.mrf.mxu0
  %214 = vmatmul.f32.gmra.mxu0 %v53
  %v215 = vpop.f32.mrf.mxu0
  %216 = vmatmul.f32.gmra.mxu0 %v53
  %v217 = vpop.f32.mrf.mxu0
  %218 = vmatmul.f32.gmra.mxu0 %v53
  %v219 = vpop.f32.mrf.mxu0
  %220 = vmatmul.f32.gmra.mxu0 %v53
  %v221 = vpop.f32.mrf.mxu0
  %222 = vdwg.mxu0
  %v224 = vsel %vm48, %v45, 0
  %v227 = vsel %vm48, %v47, 0
  %229 = vmatpush.xpose.msra.mxu0 %v53
  %230 = vmatpush.xpose.msra.mxu0 %v53
  %231 = vmatpush.xpose.msra.mxu0 %v53
  %232 = vmatpush.xpose.msra.mxu0 %v53
  %233 = vmatpush.xpose.msra.mxu0 %v53
  %234 = vmatpush.xpose.msra.mxu0 %v53
  %235 = vmatpush.xpose.msra.mxu0 %v53
  %236 = vmatpush.xpose.msra.mxu0 %v53
  %237 = vmatpush.xpose.msra.mxu0 %v53
  %238 = vmatpush.xpose.msra.mxu0 %v53
  %239 = vmatpush.xpose.msra.mxu0 %v53
  %240 = vmatpush.xpose.msra.mxu0 %v53
  %241 = vmatpush.xpose.msra.mxu0 %v53
  %242 = vmatpush.xpose.msra.mxu0 %v53
  %243 = vmatpush.xpose.msra.mxu0 %v53
  %244 = vmatpush.xpose.msra.mxu0 %v224
  %245 = vmatmul.f32.gmra.mxu0 %v224
  %v246 = vpop.f32.mrf.mxu0
  %v247 = vadd.f32 0.0, %v246
  %248 = vmatmul.f32.gmra.mxu0 %v53
  %v249 = vpop.f32.mrf.mxu0
  %250 = vmatmul.f32.gmra.mxu0 %v53
  %v251 = vpop.f32.mrf.mxu0
  %252 = vmatmul.f32.gmra.mxu0 %v53
  %v253 = vpop.f32.mrf.mxu0
  %254 = vmatmul.f32.gmra.mxu0 %v53
  %v255 = vpop.f32.mrf.mxu0
  %256 = vmatmul.f32.gmra.mxu0 %v53
  %v257 = vpop.f32.mrf.mxu0
  %258 = vmatmul.f32.gmra.mxu0 %v53
  %v259 = vpop.f32.mrf.mxu0
  %260 = vmatmul.f32.gmra.mxu0 %v53
  %v261 = vpop.f32.mrf.mxu0
  %262 = vmatmul.f32.gmra.mxu0 %v53
  %v263 = vpop.f32.mrf.mxu0
  %264 = vmatmul.f32.gmra.mxu0 %v53
  %v265 = vpop.f32.mrf.mxu0
  %266 = vmatmul.f32.gmra.mxu0 %v53
  %v267 = vpop.f32.mrf.mxu0
  %268 = vmatmul.f32.gmra.mxu0 %v53
  %v269 = vpop.f32.mrf.mxu0
  %270 = vmatmul.f32.gmra.mxu0 %v53
  %v271 = vpop.f32.mrf.mxu0
  %272 = vmatmul.f32.gmra.mxu0 %v53
  %v273 = vpop.f32.mrf.mxu0
  %274 = vmatmul.f32.gmra.mxu0 %v53
  %v275 = vpop.f32.mrf.mxu0
  %276 = vmatmul.f32.gmra.mxu0 %v53
  %v277 = vpop.f32.mrf.mxu0
  %278 = vmatmul.f32.gmra.mxu0 %v227
  %v279 = vpop.f32.mrf.mxu0
  %280 = vmatmul.f32.gmra.mxu0 %v53
  %v281 = vpop.f32.mrf.mxu0
  %282 = vmatmul.f32.gmra.mxu0 %v53
  %v283 = vpop.f32.mrf.mxu0
  %284 = vmatmul.f32.gmra.mxu0 %v53
  %v285 = vpop.f32.mrf.mxu0
  %286 = vmatmul.f32.gmra.mxu0 %v53
  %v287 = vpop.f32.mrf.mxu0
  %288 = vmatmul.f32.gmra.mxu0 %v53
  %v289 = vpop.f32.mrf.mxu0
  %290 = vmatmul.f32.gmra.mxu0 %v53
  %v291 = vpop.f32.mrf.mxu0
  %292 = vmatmul.f32.gmra.mxu0 %v53
  %v293 = vpop.f32.mrf.mxu0
  %294 = vmatmul.f32.gmra.mxu0 %v53
  %v295 = vpop.f32.mrf.mxu0
  %296 = vmatmul.f32.gmra.mxu0 %v53
  %v297 = vpop.f32.mrf.mxu0
  %298 = vmatmul.f32.gmra.mxu0 %v53
  %v299 = vpop.f32.mrf.mxu0
  %300 = vmatmul.f32.gmra.mxu0 %v53
  %v301 = vpop.f32.mrf.mxu0
  %302 = vmatmul.f32.gmra.mxu0 %v53
  %v303 = vpop.f32.mrf.mxu0
  %304 = vmatmul.f32.gmra.mxu0 %v53
  %v305 = vpop.f32.mrf.mxu0
  %306 = vmatmul.f32.gmra.mxu0 %v53
  %v307 = vpop.f32.mrf.mxu0
  %308 = vmatmul.f32.gmra.mxu0 %v53
  %v309 = vpop.f32.mrf.mxu0
  %310 = vdwg.mxu0
  %311 = vmatpush.xpose.msra.mxu0 %v53
  %312 = vmatpush.xpose.msra.mxu0 %v53
  %313 = vmatpush.xpose.msra.mxu0 %v53
  %314 = vmatpush.xpose.msra.mxu0 %v53
  %315 = vmatpush.xpose.msra.mxu0 %v53
  %316 = vmatpush.xpose.msra.mxu0 %v53
  %317 = vmatpush.xpose.msra.mxu0 %v53
  %318 = vmatpush.xpose.msra.mxu0 %v53
  %319 = vmatpush.xpose.msra.mxu0 %v53
  %320 = vmatpush.xpose.msra.mxu0 %v53
  %321 = vmatpush.xpose.msra.mxu0 %v53
  %322 = vmatpush.xpose.msra.mxu0 %v53
  %323 = vmatpush.xpose.msra.mxu0 %v53
  %324 = vmatpush.xpose.msra.mxu0 %v53
  %325 = vmatpush.xpose.msra.mxu0 %v53
  %326 = vmatpush.xpose.msra.mxu0 %v227
  %327 = vmatmul.f32.gmra.mxu0 %v224
  %v328 = vpop.f32.mrf.mxu0
  %v329 = vadd.f32 0.0, %v328
  %330 = vmatmul.f32.gmra.mxu0 %v53
  %v331 = vpop.f32.mrf.mxu0
  %332 = vmatmul.f32.gmra.mxu0 %v53
  %v333 = vpop.f32.mrf.mxu0
  %334 = vmatmul.f32.gmra.mxu0 %v53
  %v335 = vpop.f32.mrf.mxu0
  %336 = vmatmul.f32.gmra.mxu0 %v53
  %v337 = vpop.f32.mrf.mxu0
  %338 = vmatmul.f32.gmra.mxu0 %v53
  %v339 = vpop.f32.mrf.mxu0
  %340 = vmatmul.f32.gmra.mxu0 %v53
  %v341 = vpop.f32.mrf.mxu0
  %342 = vmatmul.f32.gmra.mxu0 %v53
  %v343 = vpop.f32.mrf.mxu0
  %344 = vmatmul.f32.gmra.mxu0 %v53
  %v345 = vpop.f32.mrf.mxu0
  %346 = vmatmul.f32.gmra.mxu0 %v53
  %v347 = vpop.f32.mrf.mxu0
  %348 = vmatmul.f32.gmra.mxu0 %v53
  %v349 = vpop.f32.mrf.mxu0
  %350 = vmatmul.f32.gmra.mxu0 %v53
  %v351 = vpop.f32.mrf.mxu0
  %352 = vmatmul.f32.gmra.mxu0 %v53
  %v353 = vpop.f32.mrf.mxu0
  %354 = vmatmul.f32.gmra.mxu0 %v53
  %v355 = vpop.f32.mrf.mxu0
  %356 = vmatmul.f32.gmra.mxu0 %v53
  %v357 = vpop.f32.mrf.mxu0
  %358 = vmatmul.f32.gmra.mxu0 %v53
  %v359 = vpop.f32.mrf.mxu0
  %360 = vmatmul.f32.gmra.mxu0 %v227
  %v361 = vpop.f32.mrf.mxu0
  %v362 = vadd.f32 0.0, %v361
  %363 = vmatmul.f32.gmra.mxu0 %v53
  %v364 = vpop.f32.mrf.mxu0
  %365 = vmatmul.f32.gmra.mxu0 %v53
  %v366 = vpop.f32.mrf.mxu0
  %367 = vmatmul.f32.gmra.mxu0 %v53
  %v368 = vpop.f32.mrf.mxu0
  %369 = vmatmul.f32.gmra.mxu0 %v53
  %v370 = vpop.f32.mrf.mxu0
  %371 = vmatmul.f32.gmra.mxu0 %v53
  %v372 = vpop.f32.mrf.mxu0
  %373 = vmatmul.f32.gmra.mxu0 %v53
  %v374 = vpop.f32.mrf.mxu0
  %375 = vmatmul.f32.gmra.mxu0 %v53
  %v376 = vpop.f32.mrf.mxu0
  %377 = vmatmul.f32.gmra.mxu0 %v53
  %v378 = vpop.f32.mrf.mxu0
  %379 = vmatmul.f32.gmra.mxu0 %v53
  %v380 = vpop.f32.mrf.mxu0
  %381 = vmatmul.f32.gmra.mxu0 %v53
  %v382 = vpop.f32.mrf.mxu0
  %383 = vmatmul.f32.gmra.mxu0 %v53
  %v384 = vpop.f32.mrf.mxu0
  %385 = vmatmul.f32.gmra.mxu0 %v53
  %v386 = vpop.f32.mrf.mxu0
  %387 = vmatmul.f32.gmra.mxu0 %v53
  %v388 = vpop.f32.mrf.mxu0
  %389 = vmatmul.f32.gmra.mxu0 %v53
  %v390 = vpop.f32.mrf.mxu0
  %391 = vmatmul.f32.gmra.mxu0 %v53
  %v392 = vpop.f32.mrf.mxu0
  %393 = vdwg.mxu0
  %v394 = vsub.f32 %v76, 1.0
  %v395 = vsub.f32 %v247, 1.0
  %v396 = vsub.f32 %v191, 1.0
  %v397 = vsub.f32 %v362, 1.0
  %v398 = vsub.f32 %v158, 1.0
  %v399 = vsub.f32 %v329, 1.0
  %v400 = vlaneseq
  %v401 = vshrl.u32 %v400, 7
  %v402 = vadd.s32 %v401, 8
  %v403 = vadd.s32 %v401, 16
  %v404 = vadd.s32 %v401, 24
  %v405 = vadd.s32 %v401, 32
  %v406 = vadd.s32 %v401, 40
  %v407 = vadd.s32 %v401, 48
  %v408 = vadd.s32 %v401, 56
  %v409 = vadd.s32 %v401, 64
  %v410 = vadd.s32 %v401, 72
  %v411 = vadd.s32 %v401, 80
  %v412 = vadd.s32 %v401, 88
  %v413 = vadd.s32 %v401, 96
  %v414 = vadd.s32 %v401, 104
  %v415 = vadd.s32 %v401, 112
  %v416 = vadd.s32 %v401, 120
  %v417 = vlaneseq
  %v418 = vand.u32 %v417, 127
  %vm419 = vcmp.ge.s32.totalorder %v401, 1
  %vm420 = vcmp.ge.s32.totalorder %v402, 1
  %vm421 = vcmp.ge.s32.totalorder %v403, 1
  %vm422 = vcmp.ge.s32.totalorder %v404, 1
  %vm423 = vcmp.ge.s32.totalorder %v405, 1
  %vm424 = vcmp.ge.s32.totalorder %v406, 1
  %vm425 = vcmp.ge.s32.totalorder %v407, 1
  %vm426 = vcmp.ge.s32.totalorder %v408, 1
  %vm427 = vcmp.ge.s32.totalorder %v409, 1
  %vm428 = vcmp.ge.s32.totalorder %v410, 1
  %vm429 = vcmp.ge.s32.totalorder %v411, 1
  %vm430 = vcmp.ge.s32.totalorder %v412, 1
  %vm431 = vcmp.ge.s32.totalorder %v413, 1
  %vm432 = vcmp.ge.s32.totalorder %v414, 1
  %vm433 = vcmp.ge.s32.totalorder %v415, 1
  %vm434 = vcmp.ge.s32.totalorder %v416, 1
  %vm435 = vcmp.le.s32.totalorder %v401, %v418
  %vm436 = vcmp.le.s32.totalorder %v402, %v418
  %vm437 = vcmp.le.s32.totalorder %v403, %v418
  %vm438 = vcmp.le.s32.totalorder %v404, %v418
  %vm439 = vcmp.le.s32.totalorder %v405, %v418
  %vm440 = vcmp.le.s32.totalorder %v406, %v418
  %vm441 = vcmp.le.s32.totalorder %v407, %v418
  %vm442 = vcmp.le.s32.totalorder %v408, %v418
  %vm443 = vcmp.le.s32.totalorder %v409, %v418
  %vm444 = vcmp.le.s32.totalorder %v410, %v418
  %vm445 = vcmp.le.s32.totalorder %v411, %v418
  %vm446 = vcmp.le.s32.totalorder %v412, %v418
  %vm447 = vcmp.le.s32.totalorder %v413, %v418
  %vm448 = vcmp.le.s32.totalorder %v414, %v418
  %vm449 = vcmp.le.s32.totalorder %v415, %v418
  %vm450 = vcmp.le.s32.totalorder %v416, %v418
  %vm451 = vmand %vm419, %vm435
  %vm452 = vmand %vm420, %vm436
  %vm453 = vmand %vm421, %vm437
  %vm454 = vmand %vm422, %vm438
  %vm455 = vmand %vm423, %vm439
  %vm456 = vmand %vm424, %vm440
  %vm457 = vmand %vm425, %vm441
  %vm458 = vmand %vm426, %vm442
  %vm459 = vmand %vm427, %vm443
  %vm460 = vmand %vm428, %vm444
  %vm461 = vmand %vm429, %vm445
  %vm462 = vmand %vm430, %vm446
  %vm463 = vmand %vm431, %vm447
  %vm464 = vmand %vm432, %vm448
  %vm465 = vmand %vm433, %vm449
  %vm466 = vmand %vm434, %vm450
  %v467 = vsel %vm451, 1, 0
  %v468 = vsel %vm452, 1, 0
  %v469 = vsel %vm453, 1, 0
  %v470 = vsel %vm454, 1, 0
  %v471 = vsel %vm455, 1, 0
  %v472 = vsel %vm456, 1, 0
  %v473 = vsel %vm457, 1, 0
  %v474 = vsel %vm458, 1, 0
  %v475 = vsel %vm459, 1, 0
  %v476 = vsel %vm460, 1, 0
  %v477 = vsel %vm461, 1, 0
  %v478 = vsel %vm462, 1, 0
  %v479 = vsel %vm463, 1, 0
  %v480 = vsel %vm464, 1, 0
  %v481 = vsel %vm465, 1, 0
  %v482 = vsel %vm466, 1, 0
  %v483 = vcvt.s32.f32 %v467
  %v484 = vcvt.s32.f32 %v468
  %v485 = vcvt.s32.f32 %v469
  %v486 = vcvt.s32.f32 %v470
  %v487 = vcvt.s32.f32 %v471
  %v488 = vcvt.s32.f32 %v472
  %v489 = vcvt.s32.f32 %v473
  %v490 = vcvt.s32.f32 %v474
  %v491 = vcvt.s32.f32 %v475
  %v492 = vcvt.s32.f32 %v476
  %v493 = vcvt.s32.f32 %v477
  %v494 = vcvt.s32.f32 %v478
  %v495 = vcvt.s32.f32 %v479
  %v496 = vcvt.s32.f32 %v480
  %v497 = vcvt.s32.f32 %v481
  %v498 = vcvt.s32.f32 %v482
  %vm499 = vcmp.lt.s32.totalorder %v401, %v418
  %vm500 = vcmp.lt.s32.totalorder %v402, %v418
  %vm501 = vcmp.lt.s32.totalorder %v403, %v418
  %vm502 = vcmp.lt.s32.totalorder %v404, %v418
  %vm503 = vcmp.lt.s32.totalorder %v405, %v418
  %vm504 = vcmp.lt.s32.totalorder %v406, %v418
  %vm505 = vcmp.lt.s32.totalorder %v407, %v418
  %vm506 = vcmp.lt.s32.totalorder %v408, %v418
  %vm507 = vcmp.lt.s32.totalorder %v409, %v418
  %vm508 = vcmp.lt.s32.totalorder %v410, %v418
  %vm509 = vcmp.lt.s32.totalorder %v411, %v418
  %vm510 = vcmp.lt.s32.totalorder %v412, %v418
  %vm511 = vcmp.lt.s32.totalorder %v413, %v418
  %vm512 = vcmp.lt.s32.totalorder %v414, %v418
  %vm513 = vcmp.lt.s32.totalorder %v415, %v418
  %vm514 = vcmp.lt.s32.totalorder %v416, %v418
  %v515 = vsel %vm499, 1, 0
  %v516 = vsel %vm500, 1, 0
  %v517 = vsel %vm501, 1, 0
  %v518 = vsel %vm502, 1, 0
  %v519 = vsel %vm503, 1, 0
  %v520 = vsel %vm504, 1, 0
  %v521 = vsel %vm505, 1, 0
  %v522 = vsel %vm506, 1, 0
  %v523 = vsel %vm507, 1, 0
  %v524 = vsel %vm508, 1, 0
  %v525 = vsel %vm509, 1, 0
  %v526 = vsel %vm510, 1, 0
  %v527 = vsel %vm511, 1, 0
  %v528 = vsel %vm512, 1, 0
  %v529 = vsel %vm513, 1, 0
  %v530 = vsel %vm514, 1, 0
  %v531 = vcvt.s32.f32 %v515
  %v532 = vcvt.s32.f32 %v516
  %v533 = vcvt.s32.f32 %v517
  %v534 = vcvt.s32.f32 %v518
  %v535 = vcvt.s32.f32 %v519
  %v536 = vcvt.s32.f32 %v520
  %v537 = vcvt.s32.f32 %v521
  %v538 = vcvt.s32.f32 %v522
  %v539 = vcvt.s32.f32 %v523
  %v540 = vcvt.s32.f32 %v524
  %v541 = vcvt.s32.f32 %v525
  %v542 = vcvt.s32.f32 %v526
  %v543 = vcvt.s32.f32 %v527
  %v544 = vcvt.s32.f32 %v528
  %v545 = vcvt.s32.f32 %v529
  %v546 = vcvt.s32.f32 %v530
  %547 = vmatpush.msra.mxu0 %v498
  %548 = vmatpush.msra.mxu0 %v497
  %549 = vmatpush.msra.mxu0 %v496
  %550 = vmatpush.msra.mxu0 %v495
  %551 = vmatpush.msra.mxu0 %v494
  %552 = vmatpush.msra.mxu0 %v493
  %553 = vmatpush.msra.mxu0 %v492
  %554 = vmatpush.msra.mxu0 %v491
  %555 = vmatpush.msra.mxu0 %v490
  %556 = vmatpush.msra.mxu0 %v489
  %557 = vmatpush.msra.mxu0 %v488
  %558 = vmatpush.msra.mxu0 %v487
  %559 = vmatpush.msra.mxu0 %v486
  %560 = vmatpush.msra.mxu0 %v485
  %561 = vmatpush.msra.mxu0 %v484
  %562 = vmatpush.msra.mxu0 %v483
  %563 = vmatmul.f32.gmra.mxu0 1.0
  %v564 = vpop.f32.mrf.mxu0
  %v565 = vadd.f32 1.0, %v564
  %566 = vdwg.mxu0
  %v573 = vrot.slane %v395, 7
  %vm574 = vcmask 1041409
  %v575 = vsel %vm574, %v573, %v394
  %v576 = vrot.slane %v396, 6
  %vm577 = vcmask 1042434
  %v578 = vsel %vm577, %v576, %v575
  %v579 = vrot.slane %v397, 5
  %vm580 = vcmask 1043459
  %v581 = vsel %vm580, %v579, %v578
  %v582 = vrot.slane %v398, 4
  %vm583 = vcmask 1044484
  %v584 = vsel %vm583, %v582, %v581
  %v585 = vrot.slane %v399, 3
  %vm586 = vcmask 1045509
  %v587 = vsel %vm586, %v585, %v584
  %589 = vmatpush.msra.mxu0 %v546
  %590 = vmatpush.msra.mxu0 %v545
  %591 = vmatpush.msra.mxu0 %v544
  %592 = vmatpush.msra.mxu0 %v543
  %593 = vmatpush.msra.mxu0 %v542
  %594 = vmatpush.msra.mxu0 %v541
  %595 = vmatpush.msra.mxu0 %v540
  %596 = vmatpush.msra.mxu0 %v539
  %597 = vmatpush.msra.mxu0 %v538
  %598 = vmatpush.msra.mxu0 %v537
  %599 = vmatpush.msra.mxu0 %v536
  %600 = vmatpush.msra.mxu0 %v535
  %601 = vmatpush.msra.mxu0 %v534
  %602 = vmatpush.msra.mxu0 %v533
  %603 = vmatpush.msra.mxu0 %v532
  %604 = vmatpush.msra.mxu0 %v531
  %605 = vmatmul.f32.gmra.mxu0 %v587
  %v606 = vpop.f32.mrf.mxu0
  %v607 = vadd.f32 0.0, %v606
  %608 = vdwg.mxu0
  %v609 = vadd.f32 %v565, %v607
  %v610 = vrot.slane %v394, 1
  %v611 = vsel %vm574, %v395, %v610
  %v612 = vrot.slane %v396, 7
  %v613 = vsel %vm577, %v612, %v611
  %v614 = vrot.slane %v397, 6
  %v615 = vsel %vm580, %v614, %v613
  %v616 = vrot.slane %v398, 5
  %v617 = vsel %vm583, %v616, %v615
  %v618 = vrot.slane %v399, 4
  %v619 = vsel %vm586, %v618, %v617
  %v621 = vmul.f32 %v609, %v619
  %622 = vmatpush.msra.mxu0 %v498
  %623 = vmatpush.msra.mxu0 %v497
  %624 = vmatpush.msra.mxu0 %v496
  %625 = vmatpush.msra.mxu0 %v495
  %626 = vmatpush.msra.mxu0 %v494
  %627 = vmatpush.msra.mxu0 %v493
  %628 = vmatpush.msra.mxu0 %v492
  %629 = vmatpush.msra.mxu0 %v491
  %630 = vmatpush.msra.mxu0 %v490
  %631 = vmatpush.msra.mxu0 %v489
  %632 = vmatpush.msra.mxu0 %v488
  %633 = vmatpush.msra.mxu0 %v487
  %634 = vmatpush.msra.mxu0 %v486
  %635 = vmatpush.msra.mxu0 %v485
  %636 = vmatpush.msra.mxu0 %v484
  %637 = vmatpush.msra.mxu0 %v483
  %638 = vmatmul.f32.gmra.mxu0 %v609
  %v639 = vpop.f32.mrf.mxu0
  %v640 = vadd.f32 1.0, %v639
  %641 = vdwg.mxu0
  %642 = vmatpush.msra.mxu0 %v546
  %643 = vmatpush.msra.mxu0 %v545
  %644 = vmatpush.msra.mxu0 %v544
  %645 = vmatpush.msra.mxu0 %v543
  %646 = vmatpush.msra.mxu0 %v542
  %647 = vmatpush.msra.mxu0 %v541
  %648 = vmatpush.msra.mxu0 %v540
  %649 = vmatpush.msra.mxu0 %v539
  %650 = vmatpush.msra.mxu0 %v538
  %651 = vmatpush.msra.mxu0 %v537
  %652 = vmatpush.msra.mxu0 %v536
  %653 = vmatpush.msra.mxu0 %v535
  %654 = vmatpush.msra.mxu0 %v534
  %655 = vmatpush.msra.mxu0 %v533
  %656 = vmatpush.msra.mxu0 %v532
  %657 = vmatpush.msra.mxu0 %v531
  %658 = vmatmul.f32.gmra.mxu0 %v621
  %v659 = vpop.f32.mrf.mxu0
  %v660 = vadd.f32 0.0, %v659
  %661 = vdwg.mxu0
  %v662 = vadd.f32 %v640, %v660
  %v663 = vrot.slane %v394, 2
  %v664 = vrot.slane %v395, 1
  %v665 = vsel %vm574, %v664, %v663
  %v666 = vsel %vm577, %v396, %v665
  %v667 = vrot.slane %v397, 7
  %v668 = vsel %vm580, %v667, %v666
  %v669 = vrot.slane %v398, 6
  %v670 = vsel %vm583, %v669, %v668
  %v671 = vrot.slane %v399, 5
  %v672 = vsel %vm586, %v671, %v670
  %v674 = vmul.f32 %v662, %v672
  %675 = vmatpush.msra.mxu0 %v498
  %676 = vmatpush.msra.mxu0 %v497
  %677 = vmatpush.msra.mxu0 %v496
  %678 = vmatpush.msra.mxu0 %v495
  %679 = vmatpush.msra.mxu0 %v494
  %680 = vmatpush.msra.mxu0 %v493
  %681 = vmatpush.msra.mxu0 %v492
  %682 = vmatpush.msra.mxu0 %v491
  %683 = vmatpush.msra.mxu0 %v490
  %684 = vmatpush.msra.mxu0 %v489
  %685 = vmatpush.msra.mxu0 %v488
  %686 = vmatpush.msra.mxu0 %v487
  %687 = vmatpush.msra.mxu0 %v486
  %688 = vmatpush.msra.mxu0 %v485
  %689 = vmatpush.msra.mxu0 %v484
  %690 = vmatpush.msra.mxu0 %v483
  %691 = vmatmul.f32.gmra.mxu0 %v662
  %v692 = vpop.f32.mrf.mxu0
  %v693 = vadd.f32 1.0, %v692
  %694 = vdwg.mxu0
  %695 = vmatpush.msra.mxu0 %v546
  %696 = vmatpush.msra.mxu0 %v545
  %697 = vmatpush.msra.mxu0 %v544
  %698 = vmatpush.msra.mxu0 %v543
  %699 = vmatpush.msra.mxu0 %v542
  %700 = vmatpush.msra.mxu0 %v541
  %701 = vmatpush.msra.mxu0 %v540
  %702 = vmatpush.msra.mxu0 %v539
  %703 = vmatpush.msra.mxu0 %v538
  %704 = vmatpush.msra.mxu0 %v537
  %705 = vmatpush.msra.mxu0 %v536
  %706 = vmatpush.msra.mxu0 %v535
  %707 = vmatpush.msra.mxu0 %v534
  %708 = vmatpush.msra.mxu0 %v533
  %709 = vmatpush.msra.mxu0 %v532
  %710 = vmatpush.msra.mxu0 %v531
  %711 = vmatmul.f32.gmra.mxu0 %v674
  %v712 = vpop.f32.mrf.mxu0
  %v713 = vadd.f32 0.0, %v712
  %714 = vdwg.mxu0
  %v715 = vadd.f32 %v693, %v713
  %v716 = vrot.slane %v394, 3
  %v717 = vrot.slane %v395, 2
  %v718 = vsel %vm574, %v717, %v716
  %v719 = vrot.slane %v396, 1
  %v720 = vsel %vm577, %v719, %v718
  %v721 = vsel %vm580, %v397, %v720
  %v722 = vrot.slane %v398, 7
  %v723 = vsel %vm583, %v722, %v721
  %v724 = vrot.slane %v399, 6
  %v725 = vsel %vm586, %v724, %v723
  %v727 = vmul.f32 %v715, %v725
  %728 = vmatpush.msra.mxu0 %v498
  %729 = vmatpush.msra.mxu0 %v497
  %730 = vmatpush.msra.mxu0 %v496
  %731 = vmatpush.msra.mxu0 %v495
  %732 = vmatpush.msra.mxu0 %v494
  %733 = vmatpush.msra.mxu0 %v493
  %734 = vmatpush.msra.mxu0 %v492
  %735 = vmatpush.msra.mxu0 %v491
  %736 = vmatpush.msra.mxu0 %v490
  %737 = vmatpush.msra.mxu0 %v489
  %738 = vmatpush.msra.mxu0 %v488
  %739 = vmatpush.msra.mxu0 %v487
  %740 = vmatpush.msra.mxu0 %v486
  %741 = vmatpush.msra.mxu0 %v485
  %742 = vmatpush.msra.mxu0 %v484
  %743 = vmatpush.msra.mxu0 %v483
  %744 = vmatmul.f32.gmra.mxu0 %v715
  %v745 = vpop.f32.mrf.mxu0
  %v746 = vadd.f32 1.0, %v745
  %747 = vdwg.mxu0
  %748 = vmatpush.msra.mxu0 %v546
  %749 = vmatpush.msra.mxu0 %v545
  %750 = vmatpush.msra.mxu0 %v544
  %751 = vmatpush.msra.mxu0 %v543
  %752 = vmatpush.msra.mxu0 %v542
  %753 = vmatpush.msra.mxu0 %v541
  %754 = vmatpush.msra.mxu0 %v540
  %755 = vmatpush.msra.mxu0 %v539
  %756 = vmatpush.msra.mxu0 %v538
  %757 = vmatpush.msra.mxu0 %v537
  %758 = vmatpush.msra.mxu0 %v536
  %759 = vmatpush.msra.mxu0 %v535
  %760 = vmatpush.msra.mxu0 %v534
  %761 = vmatpush.msra.mxu0 %v533
  %762 = vmatpush.msra.mxu0 %v532
  %763 = vmatpush.msra.mxu0 %v531
  %764 = vmatmul.f32.gmra.mxu0 %v727
  %v765 = vpop.f32.mrf.mxu0
  %v766 = vadd.f32 0.0, %v765
  %767 = vdwg.mxu0
  %v768 = vadd.f32 %v746, %v766
  %v769 = vrot.slane %v394, 4
  %v770 = vrot.slane %v395, 3
  %v771 = vsel %vm574, %v770, %v769
  %v772 = vrot.slane %v396, 2
  %v773 = vsel %vm577, %v772, %v771
  %v774 = vrot.slane %v397, 1
  %v775 = vsel %vm580, %v774, %v773
  %v776 = vsel %vm583, %v398, %v775
  %v777 = vrot.slane %v399, 7
  %v778 = vsel %vm586, %v777, %v776
  %v780 = vmul.f32 %v768, %v778
  %781 = vmatpush.msra.mxu0 %v498
  %782 = vmatpush.msra.mxu0 %v497
  %783 = vmatpush.msra.mxu0 %v496
  %784 = vmatpush.msra.mxu0 %v495
  %785 = vmatpush.msra.mxu0 %v494
  %786 = vmatpush.msra.mxu0 %v493
  %787 = vmatpush.msra.mxu0 %v492
  %788 = vmatpush.msra.mxu0 %v491
  %789 = vmatpush.msra.mxu0 %v490
  %790 = vmatpush.msra.mxu0 %v489
  %791 = vmatpush.msra.mxu0 %v488
  %792 = vmatpush.msra.mxu0 %v487
  %793 = vmatpush.msra.mxu0 %v486
  %794 = vmatpush.msra.mxu0 %v485
  %795 = vmatpush.msra.mxu0 %v484
  %796 = vmatpush.msra.mxu0 %v483
  %797 = vmatmul.f32.gmra.mxu0 %v768
  %v798 = vpop.f32.mrf.mxu0
  %v799 = vadd.f32 1.0, %v798
  %800 = vdwg.mxu0
  %801 = vmatpush.msra.mxu0 %v546
  %802 = vmatpush.msra.mxu0 %v545
  %803 = vmatpush.msra.mxu0 %v544
  %804 = vmatpush.msra.mxu0 %v543
  %805 = vmatpush.msra.mxu0 %v542
  %806 = vmatpush.msra.mxu0 %v541
  %807 = vmatpush.msra.mxu0 %v540
  %808 = vmatpush.msra.mxu0 %v539
  %809 = vmatpush.msra.mxu0 %v538
  %810 = vmatpush.msra.mxu0 %v537
  %811 = vmatpush.msra.mxu0 %v536
  %812 = vmatpush.msra.mxu0 %v535
  %813 = vmatpush.msra.mxu0 %v534
  %814 = vmatpush.msra.mxu0 %v533
  %815 = vmatpush.msra.mxu0 %v532
  %816 = vmatpush.msra.mxu0 %v531
  %817 = vmatmul.f32.gmra.mxu0 %v780
  %v818 = vpop.f32.mrf.mxu0
  %v819 = vadd.f32 0.0, %v818
  %820 = vdwg.mxu0
  %v821 = vadd.f32 %v799, %v819
  %v822 = vrot.slane %v394, 5
  %v823 = vrot.slane %v395, 4
  %v824 = vsel %vm574, %v823, %v822
  %v825 = vrot.slane %v396, 3
  %v826 = vsel %vm577, %v825, %v824
  %v827 = vrot.slane %v397, 2
  %v828 = vsel %vm580, %v827, %v826
  %v829 = vrot.slane %v398, 1
  %v830 = vsel %vm583, %v829, %v828
  %v831 = vsel %vm586, %v399, %v830
  %v833 = vmul.f32 %v821, %v831
  %834 = vmatpush.msra.mxu0 %v498
  %835 = vmatpush.msra.mxu0 %v497
  %836 = vmatpush.msra.mxu0 %v496
  %837 = vmatpush.msra.mxu0 %v495
  %838 = vmatpush.msra.mxu0 %v494
  %839 = vmatpush.msra.mxu0 %v493
  %840 = vmatpush.msra.mxu0 %v492
  %841 = vmatpush.msra.mxu0 %v491
  %842 = vmatpush.msra.mxu0 %v490
  %843 = vmatpush.msra.mxu0 %v489
  %844 = vmatpush.msra.mxu0 %v488
  %845 = vmatpush.msra.mxu0 %v487
  %846 = vmatpush.msra.mxu0 %v486
  %847 = vmatpush.msra.mxu0 %v485
  %848 = vmatpush.msra.mxu0 %v484
  %849 = vmatpush.msra.mxu0 %v483
  %850 = vmatmul.f32.gmra.mxu0 %v821
  %v851 = vpop.f32.mrf.mxu0
  %v852 = vadd.f32 1.0, %v851
  %853 = vdwg.mxu0
  %854 = vmatpush.msra.mxu0 %v546
  %855 = vmatpush.msra.mxu0 %v545
  %856 = vmatpush.msra.mxu0 %v544
  %857 = vmatpush.msra.mxu0 %v543
  %858 = vmatpush.msra.mxu0 %v542
  %859 = vmatpush.msra.mxu0 %v541
  %860 = vmatpush.msra.mxu0 %v540
  %861 = vmatpush.msra.mxu0 %v539
  %862 = vmatpush.msra.mxu0 %v538
  %863 = vmatpush.msra.mxu0 %v537
  %864 = vmatpush.msra.mxu0 %v536
  %865 = vmatpush.msra.mxu0 %v535
  %866 = vmatpush.msra.mxu0 %v534
  %867 = vmatpush.msra.mxu0 %v533
  %868 = vmatpush.msra.mxu0 %v532
  %869 = vmatpush.msra.mxu0 %v531
  %870 = vmatmul.f32.gmra.mxu0 %v833
  %v871 = vpop.f32.mrf.mxu0
  %v872 = vadd.f32 0.0, %v871
  %873 = vdwg.mxu0
  %v874 = vadd.f32 %v852, %v872
  %v875 = vrot.slane %v394, 6
  %v876 = vrot.slane %v395, 5
  %v877 = vsel %vm574, %v876, %v875
  %v878 = vrot.slane %v396, 4
  %v879 = vsel %vm577, %v878, %v877
  %v880 = vrot.slane %v397, 3
  %v881 = vsel %vm580, %v880, %v879
  %v882 = vrot.slane %v398, 2
  %v883 = vsel %vm583, %v882, %v881
  %v884 = vrot.slane %v399, 1
  %v885 = vsel %vm586, %v884, %v883
  %v887 = vmul.f32 %v874, %v885
  %888 = vmatpush.msra.mxu0 %v498
  %889 = vmatpush.msra.mxu0 %v497
  %890 = vmatpush.msra.mxu0 %v496
  %891 = vmatpush.msra.mxu0 %v495
  %892 = vmatpush.msra.mxu0 %v494
  %893 = vmatpush.msra.mxu0 %v493
  %894 = vmatpush.msra.mxu0 %v492
  %895 = vmatpush.msra.mxu0 %v491
  %896 = vmatpush.msra.mxu0 %v490
  %897 = vmatpush.msra.mxu0 %v489
  %898 = vmatpush.msra.mxu0 %v488
  %899 = vmatpush.msra.mxu0 %v487
  %900 = vmatpush.msra.mxu0 %v486
  %901 = vmatpush.msra.mxu0 %v485
  %902 = vmatpush.msra.mxu0 %v484
  %903 = vmatpush.msra.mxu0 %v483
  %904 = vmatmul.f32.gmra.mxu0 %v874
  %v905 = vpop.f32.mrf.mxu0
  %v906 = vadd.f32 1.0, %v905
  %907 = vdwg.mxu0
  %908 = vmatpush.msra.mxu0 %v546
  %909 = vmatpush.msra.mxu0 %v545
  %910 = vmatpush.msra.mxu0 %v544
  %911 = vmatpush.msra.mxu0 %v543
  %912 = vmatpush.msra.mxu0 %v542
  %913 = vmatpush.msra.mxu0 %v541
  %914 = vmatpush.msra.mxu0 %v540
  %915 = vmatpush.msra.mxu0 %v539
  %916 = vmatpush.msra.mxu0 %v538
  %917 = vmatpush.msra.mxu0 %v537
  %918 = vmatpush.msra.mxu0 %v536
  %919 = vmatpush.msra.mxu0 %v535
  %920 = vmatpush.msra.mxu0 %v534
  %921 = vmatpush.msra.mxu0 %v533
  %922 = vmatpush.msra.mxu0 %v532
  %923 = vmatpush.msra.mxu0 %v531
  %924 = vmatmul.f32.gmra.mxu0 %v887
  %v925 = vpop.f32.mrf.mxu0
  %v926 = vadd.f32 0.0, %v925
  %927 = vdwg.mxu0
  %v928 = vadd.f32 %v906, %v926
  %vm929 = vcmp.eq.s32.totalorder %v418, 7
  %v930 = vsel %vm929, %v928, 0.0
  %vm931 = vcmp.lt.s32.totalorder %v401, 4
  %v932 = vsel %vm931, 1.0, -2.0
  %v933 = vmul.f32 %v930, %v932
  %vm934 = vcmask 1045504
  %v935 = vsel %vm934, %v933, 0.0
  %936 = vadd.xlane.f32.xlu0 %v935
  %v937 = vpop.xlane.xlu0 %936
  %v938 = vrot.slane %v937, 4
  %v939 = vadd.f32 %v937, %v938
  %v940 = vrot.slane %v939, 2
  %v941 = vadd.f32 %v939, %v940
  %v942 = vrot.slane %v941, 1
  %v943 = vadd.f32 %v941, %v942
  %s944 = vtos %v943
  %v945 = vsub.f32 %v11, %v13
  %v946 = vsub.f32 %v12, %v14
  %v947 = vmul.f32 %v945, %v945
  %v948 = vmul.f32 %v946, %v946
  %v951 = vrot.slane %v948, 7
  %v952 = vsel %vm574, %v951, %v947
  %vm954 = vcmask 25600
  %v955 = vsel %vm954, %v952, 0.0
  %956 = vadd.xlane.f32.xlu0 %v955
  %v957 = vpop.xlane.xlu0 %956
  %v958 = vrot.slane %v957, 4
  %v959 = vadd.f32 %v957, %v958
  %v960 = vrot.slane %v959, 2
  %v961 = vadd.f32 %v959, %v960
  %v962 = vrot.slane %v961, 1
  %v963 = vadd.f32 %v961, %v962
  %s964 = vtos %v963
  %vm965 = vcmp.eq.s32.totalorder %v401, 0
  %vm966 = vcmp.eq.s32.totalorder %v418, 0
  %vm967 = vmand %vm965, %vm966
  %v968 = vstv %s944
  %v969 = vsel %vm967, %v968, 0.0
  %vm970 = vcmp.eq.s32.totalorder %v418, 1
  %vm971 = vmand %vm965, %vm970
  %v972 = vstv %s964
  %v973 = vsel %vm971, %v972, 0.0
  %v974 = vadd.f32 %v969, %v973
  %975 = vst [vmem:[%s2] sm:$0xff] %v974
  // Predicated region
  $region10: #{sigloss_pallas.1} parent=0 // pred_check
    _
  $region11: #{sigloss_pallas.1} parent=0 // pred_check_branch
    %977 = sbr.rel (0) target = $region13
  $region12: #{sigloss_pallas.1} parent=0 // pred_region
    _
  $region13: #{sigloss_pallas.1} parent=0 // pred_fallthru
    _
  // Predicated region
  $region14: #{sigloss_pallas.1} parent=0 // pred_check
    _
  $region15: #{sigloss_pallas.1} parent=0 // pred_check_branch
    %979 = sbr.rel (0) target = $region17
  $region16: #{sigloss_pallas.1} parent=0 // pred_region
    _
  $region17: #{sigloss_pallas.1} parent=0 // pred_fallthru
    _

</llo_original>
